<compile_context>
chip_gen: v6e
topology: v6e:2x2x1
jax: 0.10.0
libtpu: 0.0.40
codegen_flags: <defaults>
</compile_context>

<pallas_src>
import functools

import jax
import jax.numpy as jnp
from jax.experimental import pallas as pl
from jax.experimental.pallas import tpu as pltpu  # noqa: F401  (TPU backend)


def _convt_kernel(w_ref, x_ref, y_ref):
    # Single MXU matmul: (Co*Kw, Ci) @ (Ci, M_pad) -> (Co*Kw, M_pad), lane-dense.
    y_ref[...] = jnp.dot(w_ref[...], x_ref[...],
                         preferred_element_type=jnp.float32)


def conv_transpose_model(x, weight, stride_w=3):
    """x: (N, Ci, H, Wi) float32 NCHW; weight: (Ci, Co, 1, Kw) (PyTorch layout)."""
    N, Ci, H, Wi = x.shape
    Co, Kw = weight.shape[1], weight.shape[3]
    S = stride_w
    Wo = (Wi - 1) * S + Kw                      # 62 for Wi=20, S=3, Kw=5
    M = N * H * Wi                              # 800
    M_pad = pl.cdiv(M, 128) * 128               # 896 -> unmasked lane-dense stores

    # ---- glue (fused under jit): channels-first flatten + zero-pad columns ----
    x_flat = jnp.transpose(x, (1, 0, 2, 3)).reshape(Ci, M)          # (Ci, N*H*Wi)
    x_flat = jax.lax.pad(x_flat, jnp.array(0.0, dtype=x.dtype),
                         ((0, 0, 0), (0, M_pad - M, 0)))            # (Ci, M_pad)

    # weight (Ci, Co, 1, Kw) -> (Co*Kw, Ci).  No tap flip in the overlap-add
    # formulation: out[.., 3*wi + kw] += weight[ci, co, 0, kw] * x[ci, .., wi].
    w2 = jnp.transpose(weight[:, :, 0, :], (1, 2, 0)).reshape(Co * Kw, Ci)

    # ---- Pallas kernel: single full-array block (working set ~180 KB) ----
    y = pl.pallas_call(
        _convt_kernel,
        out_shape=jax.ShapeDtypeStruct((Co * Kw, M_pad), jnp.float32),
        in_specs=[
            pl.BlockSpec((Co * Kw, Ci), lambda: (0, 0)),    # (35, 15)  Ci on sublanes
            pl.BlockSpec((Ci, M_pad), lambda: (0, 0)),      # (15, 896) M on lanes
        ],
        out_specs=pl.BlockSpec((Co * Kw, M_pad), lambda: (0, 0)),   # (35, 896)
        cost_estimate=pl.CostEstimate(
            flops=2 * (Co * Kw) * Ci * M_pad,
            transcendentals=0,
            bytes_accessed=4 * ((Co * Kw) * Ci + Ci * M_pad + (Co * Kw) * M_pad)),
    )(w2, x_flat)

    # ---- overlap-add tail (tiny XLA fusion): Kw static dilate-shift-pads + add ----
    # Element wi of tap kw lands at output index kw + S*wi (lax.pad interior = S-1).
    y4 = y[:, :M].reshape(Co, Kw, N * H, Wi)                        # (Co, Kw, NH, Wi)
    zero = jnp.array(0.0, jnp.float32)
    v1 = sum(jax.lax.pad(y4[:, kw], zero,
                         ((0, 0, 0), (0, 0, 0), (kw, Kw - 1 - kw, S - 1)))
             for kw in range(Kw))                                   # (Co, NH, Wo)

    # v4 = where(v1 > 0, v1, v1 * 1.0) is an exact identity -> return v1 directly.
    return v1.reshape(Co, N, H, Wo).transpose(1, 0, 2, 3)           # (N, Co, H, Wo)


def _reference(x, weight, stride_w=3):
    """Pure-JAX reference of ConvTranspose2d(15,7,(1,5),(1,3)) + where pass-through."""
    N, Ci, H, Wi = x.shape
    Co, Kw = weight.shape[1], weight.shape[3]
    Wo = (Wi - 1) * stride_w + Kw
    t = jnp.einsum('nchw,cok->nohwk', x, weight[:, :, 0, :])        # (N,Co,H,Wi,Kw)
    wo_idx = (jnp.arange(Wi)[:, None] * stride_w + jnp.arange(Kw)[None, :]).reshape(-1)
    v1 = jnp.zeros((N, Co, H, Wo), jnp.float32).at[:, :, :, wo_idx].add(
        t.reshape(N, Co, H, Wi * Kw))
    return jnp.where(v1 > 0, v1, v1 * 1.0)


if __name__ == "__main__":
    key = jax.random.PRNGKey(0)
    kx, kw = jax.random.split(key)

    # Shapes implied by the module: x (1, 15, 40, 20), weight (15, 7, 1, 5).
    x = jax.random.normal(kx, (1, 15, 40, 20), dtype=jnp.float32)
    weight = jax.random.normal(kw, (15, 7, 1, 5), dtype=jnp.float32) * 0.1

    model = jax.jit(functools.partial(conv_transpose_model, stride_w=3))
    out = model(x, weight)
    out = jax.block_until_ready(out)

    ref = _reference(x, weight)
    assert out.shape == (1, 7, 40, 62), out.shape
    assert jnp.allclose(out, ref, atol=1e-4, rtol=1e-4), float(jnp.max(jnp.abs(out - ref)))

    print("KERNEL_OK")
</pallas_src>

<mosaic_0001>
module attributes {stable_mosaic.version = 11 : i64} {
  func.func @_convt_kernel(%arg0: memref<35x15xf32, #tpu.memory_space<vmem>>, %arg1: memref<15x896xf32, #tpu.memory_space<vmem>>, %arg2: memref<35x896xf32, #tpu.memory_space<vmem>>) attributes {dimension_semantics = [], scalar_prefetch = 0 : i64, scratch_operands = 0 : i64, tpu.core_type = #tpu.core_type<tc>} {
    %c0 = arith.constant 0 : index
    %c0_0 = arith.constant 0 : index
    %0 = vector.load %arg0[%c0, %c0_0] : memref<35x15xf32, #tpu.memory_space<vmem>>, vector<35x15xf32>
    %c0_1 = arith.constant 0 : index
    %c0_2 = arith.constant 0 : index
    %1 = vector.load %arg1[%c0_1, %c0_2] : memref<15x896xf32, #tpu.memory_space<vmem>>, vector<15x896xf32>
    %cst = arith.constant dense<0.000000e+00> : vector<35x896xf32>
    %2 = tpu.matmul %0, %1, %cst {dimension_numbers = #tpu.dot_dimension_numbers<[1], [0], [0], [1], [0, 0, 1, 1], [], []>} : vector<35x15xf32>, vector<15x896xf32>, vector<35x896xf32> -> vector<35x896xf32>
    %c0_3 = arith.constant 0 : index
    %c0_4 = arith.constant 0 : index
    %3 = vector.load %arg2[%c0_3, %c0_4] : memref<35x896xf32, #tpu.memory_space<vmem>>, vector<35x896xf32>
    tpu.vector_store %arg2[%c0_3, %c0_4], %2 {strides = array<i32>} : memref<35x896xf32, #tpu.memory_space<vmem>>, vector<35x896xf32>,
    return
  }
}

</mosaic_0001>

<llo_original>
// kernel: conv_transpose_model.1
$region0: #{conv_transpose_model.1}
  #allocation0 [shape = 'u32[]', space=smem, size = 0x4, offset = 0x4, fixed_abs, tag = 'smem constant byte address 0x4 - core index']
  #allocation1 [shape = 'u32[144,128]{1,0:T(1,128)}', space=vmem, size = 0x12000, scoped, tag = 'internal scratch']
  %s0 = inlined_call_operand.vmem [shape: f32[35,15], index: 0, kind: input, shape index: {}]
  %s1 = inlined_call_operand.vmem [shape: f32[15,896], index: 1, kind: input, shape index: {}]
  %s2 = inlined_call_operand.vmem [shape: f32[35,896], index: 2, kind: output, shape index: {}]
  %s3 = sld [smem:[#allocation0]]
  $region18: #{conv_transpose_model.1} parent=0
    _
  %s5 = ssub.s32 1, %s3
  %s6 = scalar_select 0, %s5, %s3
  // Predicated region
  $region2: #{conv_transpose_model.1} parent=0 // pred_check
    _
  $region3: #{conv_transpose_model.1} parent=0 // pred_check_branch
    %8 = sbr.rel (0) target = $region5
  $region4: #{conv_transpose_model.1} parent=0 // pred_region
    _
  $region5: #{conv_transpose_model.1} parent=0 // pred_fallthru
    _
  // Predicated region
  $region6: #{conv_transpose_model.1} parent=0 // pred_check
    _
  $region7: #{conv_transpose_model.1} parent=0 // pred_check_branch
    %10 = sbr.rel (0) target = $region9
  $region8: #{conv_transpose_model.1} parent=0 // pred_region
    _
  $region9: #{conv_transpose_model.1} parent=0 // pred_fallthru
    _
  %v11 = vld [vmem:[%s0] sm:$0xff]
  %v12 = vld [vmem:[%s0 + $0x8] sm:$0xff]
  %v13 = vld [vmem:[%s0 + $0x10] sm:$0xff]
  %v14 = vld [vmem:[%s0 + $0x18] sm:$0xff]
  %v15 = vld [vmem:[%s0 + $0x20] sm:$0x7]
  %v16 = vld [vmem:[%s1] sm:$0xff]
  %v17 = vld [vmem:[%s1 + $0x8] sm:$0xff]
  %v18 = vld [vmem:[%s1 + $0x10] sm:$0xff]
  %v19 = vld [vmem:[%s1 + $0x18] sm:$0xff]
  %v20 = vld [vmem:[%s1 + $0x20] sm:$0xff]
  %v21 = vld [vmem:[%s1 + $0x28] sm:$0xff]
  %v22 = vld [vmem:[%s1 + $0x30] sm:$0xff]
  %v23 = vld [vmem:[%s1 + $0x38] sm:$0x7f]
  %v24 = vld [vmem:[%s1 + $0x40] sm:$0x7f]
  %v25 = vld [vmem:[%s1 + $0x48] sm:$0x7f]
  %v26 = vld [vmem:[%s1 + $0x50] sm:$0x7f]
  %v27 = vld [vmem:[%s1 + $0x58] sm:$0x7f]
  %v28 = vld [vmem:[%s1 + $0x60] sm:$0x7f]
  %v29 = vld [vmem:[%s1 + $0x68] sm:$0x7f]
  %vm30 = vcmask 121856
  %v32 = vsel %vm30, %v11, 0
  %v35 = vsel %vm30, %v12, 0
  %v38 = vsel %vm30, %v13, 0
  %v41 = vsel %vm30, %v14, 0
  %v44 = vsel %vm30, %v15, 0
  %vm46 = vcmask 1046528
  %v48 = vsel %vm46, %v23, 0
  %v51 = vsel %vm46, %v24, 0
  %v54 = vsel %vm46, %v25, 0
  %v57 = vsel %vm46, %v26, 0
  %v60 = vsel %vm46, %v27, 0
  %v63 = vsel %vm46, %v28, 0
  %v66 = vsel %vm46, %v29, 0
  %68 = vmatprep.subr.mxu0 0.0
  %69 = vmatpush1.msra.mxu0 0.0
  %70 = vmatprep.subr.mxu0 0.0
  %71 = vmatpush1.msra.mxu0 0.0
  %72 = vmatprep.subr.mxu0 0.0
  %73 = vmatpush1.msra.mxu0 0.0
  %74 = vmatprep.subr.mxu0 0.0
  %75 = vmatpush1.msra.mxu0 0.0
  %76 = vmatprep.subr.mxu0 0.0
  %77 = vmatpush1.msra.mxu0 0.0
  %78 = vmatprep.subr.mxu0 0.0
  %79 = vmatpush1.msra.mxu0 0.0
  %80 = vmatprep.subr.mxu0 0.0
  %81 = vmatpush1.msra.mxu0 0.0
  %82 = vmatprep.subr.mxu0 0.0
  %83 = vmatpush1.msra.mxu0 0.0
  %84 = vmatprep.subr.mxu0 0.0
  %85 = vmatpush1.msra.mxu0 0.0
  %86 = vmatprep.subr.mxu0 0.0
  %87 = vmatpush1.msra.mxu0 0.0
  %88 = vmatprep.subr.mxu0 0.0
  %89 = vmatpush1.msra.mxu0 0.0
  %90 = vmatprep.subr.mxu0 0.0
  %91 = vmatpush1.msra.mxu0 0.0
  %92 = vmatprep.subr.mxu0 0.0
  %93 = vmatpush1.msra.mxu0 0.0
  %94 = vmatprep.subr.mxu0 0.0
  %95 = vmatpush1.msra.mxu0 0.0
  %96 = vmatprep.subr.mxu0 %v51
  %97 = vmatpush1.msra.mxu0 %v48
  %98 = vmatprep.subr.mxu0 %v17
  %99 = vmatpush1.msra.mxu0 %v16
  %100 = vmatprep.subr.mxu0 0.0
  %101 = vmatpush2.msra.mxu0 0.0
  %102 = vmatprep.subr.mxu0 0.0
  %103 = vmatpush2.msra.mxu0 0.0
  %104 = vmatprep.subr.mxu0 0.0
  %105 = vmatpush2.msra.mxu0 0.0
  %106 = vmatprep.subr.mxu0 0.0
  %107 = vmatpush2.msra.mxu0 0.0
  %108 = vmatprep.subr.mxu0 0.0
  %109 = vmatpush2.msra.mxu0 0.0
  %110 = vmatprep.subr.mxu0 0.0
  %111 = vmatpush2.msra.mxu0 0.0
  %112 = vmatprep.subr.mxu0 0.0
  %113 = vmatpush2.msra.mxu0 0.0
  %114 = vmatprep.subr.mxu0 0.0
  %115 = vmatpush2.msra.mxu0 0.0
  %116 = vmatprep.subr.mxu0 0.0
  %117 = vmatpush2.msra.mxu0 0.0
  %118 = vmatprep.subr.mxu0 0.0
  %119 = vmatpush2.msra.mxu0 0.0
  %120 = vmatprep.subr.mxu0 0.0
  %121 = vmatpush2.msra.mxu0 0.0
  %122 = vmatprep.subr.mxu0 0.0
  %123 = vmatpush2.msra.mxu0 0.0
  %124 = vmatprep.subr.mxu0 0.0
  %125 = vmatpush2.msra.mxu0 0.0
  %126 = vmatprep.subr.mxu0 0.0
  %127 = vmatpush2.msra.mxu0 0.0
  %128 = vmatprep.subr.mxu0 0.0
  %129 = vmatpush2.msra.mxu0 0.0
  %130 = vmatprep.subr.mxu0 0.0
  %131 = vmatpush2.msra.mxu0 0.0
  %132 = vmatprep.mubr.f32.mxu0 0.0
  %133 = vmatmul.mubr.f32.gmra.mxu0 %v32
  %v134 = vpop.f32.mrf.mxu0
  %v135 = vadd.f32 0.0, %v134
  %v136 = vpop.f32.mrf.mxu0
  %v137 = vadd.f32 0.0, %v136
  %138 = vmatprep.mubr.f32.mxu0 0.0
  %139 = vmatmul.mubr.f32.gmra.mxu0 %v35
  %v140 = vpop.f32.mrf.mxu0
  %v141 = vadd.f32 0.0, %v140
  %v142 = vpop.f32.mrf.mxu0
  %v143 = vadd.f32 0.0, %v142
  %144 = vmatprep.mubr.f32.mxu0 0.0
  %145 = vmatmul.mubr.f32.gmra.mxu0 %v38
  %v146 = vpop.f32.mrf.mxu0
  %v147 = vadd.f32 0.0, %v146
  %v148 = vpop.f32.mrf.mxu0
  %v149 = vadd.f32 0.0, %v148
  %150 = vmatprep.mubr.f32.mxu0 0.0
  %151 = vmatmul.mubr.f32.gmra.mxu0 %v41
  %v152 = vpop.f32.mrf.mxu0
  %v153 = vadd.f32 0.0, %v152
  %v154 = vpop.f32.mrf.mxu0
  %v155 = vadd.f32 0.0, %v154
  %156 = vmatprep.mubr.f32.mxu0 0.0
  %157 = vmatmul.mubr.f32.gmra.mxu0 %v44
  %v158 = vpop.f32.mrf.mxu0
  %v159 = vadd.f32 0.0, %v158
  %v160 = vpop.f32.mrf.mxu0
  %v161 = vadd.f32 0.0, %v160
  %162 = vdwg.mxu0
  %163 = vmatprep.subr.mxu0 0.0
  %164 = vmatpush1.msra.mxu0 0.0
  %165 = vmatprep.subr.mxu0 0.0
  %166 = vmatpush1.msra.mxu0 0.0
  %167 = vmatprep.subr.mxu0 0.0
  %168 = vmatpush1.msra.mxu0 0.0
  %169 = vmatprep.subr.mxu0 0.0
  %170 = vmatpush1.msra.mxu0 0.0
  %171 = vmatprep.subr.mxu0 0.0
  %172 = vmatpush1.msra.mxu0 0.0
  %173 = vmatprep.subr.mxu0 0.0
  %174 = vmatpush1.msra.mxu0 0.0
  %175 = vmatprep.subr.mxu0 0.0
  %176 = vmatpush1.msra.mxu0 0.0
  %177 = vmatprep.subr.mxu0 0.0
  %178 = vmatpush1.msra.mxu0 0.0
  %179 = vmatprep.subr.mxu0 0.0
  %180 = vmatpush1.msra.mxu0 0.0
  %181 = vmatprep.subr.mxu0 0.0
  %182 = vmatpush1.msra.mxu0 0.0
  %183 = vmatprep.subr.mxu0 0.0
  %184 = vmatpush1.msra.mxu0 0.0
  %185 = vmatprep.subr.mxu0 0.0
  %186 = vmatpush1.msra.mxu0 0.0
  %187 = vmatprep.subr.mxu0 0.0
  %188 = vmatpush1.msra.mxu0 0.0
  %189 = vmatprep.subr.mxu0 0.0
  %190 = vmatpush1.msra.mxu0 0.0
  %191 = vmatprep.subr.mxu0 %v57
  %192 = vmatpush1.msra.mxu0 %v54
  %193 = vmatprep.subr.mxu0 %v19
  %194 = vmatpush1.msra.mxu0 %v18
  %195 = vmatprep.subr.mxu0 0.0
  %196 = vmatpush2.msra.mxu0 0.0
  %197 = vmatprep.subr.mxu0 0.0
  %198 = vmatpush2.msra.mxu0 0.0
  %199 = vmatprep.subr.mxu0 0.0
  %200 = vmatpush2.msra.mxu0 0.0
  %201 = vmatprep.subr.mxu0 0.0
  %202 = vmatpush2.msra.mxu0 0.0
  %203 = vmatprep.subr.mxu0 0.0
  %204 = vmatpush2.msra.mxu0 0.0
  %205 = vmatprep.subr.mxu0 0.0
  %206 = vmatpush2.msra.mxu0 0.0
  %207 = vmatprep.subr.mxu0 0.0
  %208 = vmatpush2.msra.mxu0 0.0
  %209 = vmatprep.subr.mxu0 0.0
  %210 = vmatpush2.msra.mxu0 0.0
  %211 = vmatprep.subr.mxu0 0.0
  %212 = vmatpush2.msra.mxu0 0.0
  %213 = vmatprep.subr.mxu0 0.0
  %214 = vmatpush2.msra.mxu0 0.0
  %215 = vmatprep.subr.mxu0 0.0
  %216 = vmatpush2.msra.mxu0 0.0
  %217 = vmatprep.subr.mxu0 0.0
  %218 = vmatpush2.msra.mxu0 0.0
  %219 = vmatprep.subr.mxu0 0.0
  %220 = vmatpush2.msra.mxu0 0.0
  %221 = vmatprep.subr.mxu0 0.0
  %222 = vmatpush2.msra.mxu0 0.0
  %223 = vmatprep.subr.mxu0 0.0
  %224 = vmatpush2.msra.mxu0 0.0
  %225 = vmatprep.subr.mxu0 0.0
  %226 = vmatpush2.msra.mxu0 0.0
  %227 = vmatprep.mubr.f32.mxu0 0.0
  %228 = vmatmul.mubr.f32.gmra.mxu0 %v32
  %v229 = vpop.f32.mrf.mxu0
  %v230 = vadd.f32 0.0, %v229
  %v231 = vpop.f32.mrf.mxu0
  %v232 = vadd.f32 0.0, %v231
  %233 = vmatprep.mubr.f32.mxu0 0.0
  %234 = vmatmul.mubr.f32.gmra.mxu0 %v35
  %v235 = vpop.f32.mrf.mxu0
  %v236 = vadd.f32 0.0, %v235
  %v237 = vpop.f32.mrf.mxu0
  %v238 = vadd.f32 0.0, %v237
  %239 = vmatprep.mubr.f32.mxu0 0.0
  %240 = vmatmul.mubr.f32.gmra.mxu0 %v38
  %v241 = vpop.f32.mrf.mxu0
  %v242 = vadd.f32 0.0, %v241
  %v243 = vpop.f32.mrf.mxu0
  %v244 = vadd.f32 0.0, %v243
  %245 = vmatprep.mubr.f32.mxu0 0.0
  %246 = vmatmul.mubr.f32.gmra.mxu0 %v41
  %v247 = vpop.f32.mrf.mxu0
  %v248 = vadd.f32 0.0, %v247
  %v249 = vpop.f32.mrf.mxu0
  %v250 = vadd.f32 0.0, %v249
  %251 = vmatprep.mubr.f32.mxu0 0.0
  %252 = vmatmul.mubr.f32.gmra.mxu0 %v44
  %v253 = vpop.f32.mrf.mxu0
  %v254 = vadd.f32 0.0, %v253
  %v255 = vpop.f32.mrf.mxu0
  %v256 = vadd.f32 0.0, %v255
  %257 = vdwg.mxu0
  %258 = vmatprep.subr.mxu0 0.0
  %259 = vmatpush1.msra.mxu0 0.0
  %260 = vmatprep.subr.mxu0 0.0
  %261 = vmatpush1.msra.mxu0 0.0
  %262 = vmatprep.subr.mxu0 0.0
  %263 = vmatpush1.msra.mxu0 0.0
  %264 = vmatprep.subr.mxu0 0.0
  %265 = vmatpush1.msra.mxu0 0.0
  %266 = vmatprep.subr.mxu0 0.0
  %267 = vmatpush1.msra.mxu0 0.0
  %268 = vmatprep.subr.mxu0 0.0
  %269 = vmatpush1.msra.mxu0 0.0
  %270 = vmatprep.subr.mxu0 0.0
  %271 = vmatpush1.msra.mxu0 0.0
  %272 = vmatprep.subr.mxu0 0.0
  %273 = vmatpush1.msra.mxu0 0.0
  %274 = vmatprep.subr.mxu0 0.0
  %275 = vmatpush1.msra.mxu0 0.0
  %276 = vmatprep.subr.mxu0 0.0
  %277 = vmatpush1.msra.mxu0 0.0
  %278 = vmatprep.subr.mxu0 0.0
  %279 = vmatpush1.msra.mxu0 0.0
  %280 = vmatprep.subr.mxu0 0.0
  %281 = vmatpush1.msra.mxu0 0.0
  %282 = vmatprep.subr.mxu0 0.0
  %283 = vmatpush1.msra.mxu0 0.0
  %284 = vmatprep.subr.mxu0 0.0
  %285 = vmatpush1.msra.mxu0 0.0
  %286 = vmatprep.subr.mxu0 %v63
  %287 = vmatpush1.msra.mxu0 %v60
  %288 = vmatprep.subr.mxu0 %v21
  %289 = vmatpush1.msra.mxu0 %v20
  %290 = vmatprep.subr.mxu0 0.0
  %291 = vmatpush2.msra.mxu0 0.0
  %292 = vmatprep.subr.mxu0 0.0
  %293 = vmatpush2.msra.mxu0 0.0
  %294 = vmatprep.subr.mxu0 0.0
  %295 = vmatpush2.msra.mxu0 0.0
  %296 = vmatprep.subr.mxu0 0.0
  %297 = vmatpush2.msra.mxu0 0.0
  %298 = vmatprep.subr.mxu0 0.0
  %299 = vmatpush2.msra.mxu0 0.0
  %300 = vmatprep.subr.mxu0 0.0
  %301 = vmatpush2.msra.mxu0 0.0
  %302 = vmatprep.subr.mxu0 0.0
  %303 = vmatpush2.msra.mxu0 0.0
  %304 = vmatprep.subr.mxu0 0.0
  %305 = vmatpush2.msra.mxu0 0.0
  %306 = vmatprep.subr.mxu0 0.0
  %307 = vmatpush2.msra.mxu0 0.0
  %308 = vmatprep.subr.mxu0 0.0
  %309 = vmatpush2.msra.mxu0 0.0
  %310 = vmatprep.subr.mxu0 0.0
  %311 = vmatpush2.msra.mxu0 0.0
  %312 = vmatprep.subr.mxu0 0.0
  %313 = vmatpush2.msra.mxu0 0.0
  %314 = vmatprep.subr.mxu0 0.0
  %315 = vmatpush2.msra.mxu0 0.0
  %316 = vmatprep.subr.mxu0 0.0
  %317 = vmatpush2.msra.mxu0 0.0
  %318 = vmatprep.subr.mxu0 0.0
  %319 = vmatpush2.msra.mxu0 0.0
  %320 = vmatprep.subr.mxu0 0.0
  %321 = vmatpush2.msra.mxu0 0.0
  %322 = vmatprep.mubr.f32.mxu0 0.0
  %323 = vmatmul.mubr.f32.gmra.mxu0 %v32
  %v324 = vpop.f32.mrf.mxu0
  %v325 = vadd.f32 0.0, %v324
  %v326 = vpop.f32.mrf.mxu0
  %v327 = vadd.f32 0.0, %v326
  %328 = vmatprep.mubr.f32.mxu0 0.0
  %329 = vmatmul.mubr.f32.gmra.mxu0 %v35
  %v330 = vpop.f32.mrf.mxu0
  %v331 = vadd.f32 0.0, %v330
  %v332 = vpop.f32.mrf.mxu0
  %v333 = vadd.f32 0.0, %v332
  %334 = vmatprep.mubr.f32.mxu0 0.0
  %335 = vmatmul.mubr.f32.gmra.mxu0 %v38
  %v336 = vpop.f32.mrf.mxu0
  %v337 = vadd.f32 0.0, %v336
  %v338 = vpop.f32.mrf.mxu0
  %v339 = vadd.f32 0.0, %v338
  %340 = vmatprep.mubr.f32.mxu0 0.0
  %341 = vmatmul.mubr.f32.gmra.mxu0 %v41
  %v342 = vpop.f32.mrf.mxu0
  %v343 = vadd.f32 0.0, %v342
  %v344 = vpop.f32.mrf.mxu0
  %v345 = vadd.f32 0.0, %v344
  %346 = vmatprep.mubr.f32.mxu0 0.0
  %347 = vmatmul.mubr.f32.gmra.mxu0 %v44
  %v348 = vpop.f32.mrf.mxu0
  %v349 = vadd.f32 0.0, %v348
  %v350 = vpop.f32.mrf.mxu0
  %v351 = vadd.f32 0.0, %v350
  %352 = vdwg.mxu0
  %353 = vmatprep.subr.mxu0 0.0
  %354 = vmatpush1.msra.mxu0 0.0
  %355 = vmatprep.subr.mxu0 0.0
  %356 = vmatpush1.msra.mxu0 0.0
  %357 = vmatprep.subr.mxu0 0.0
  %358 = vmatpush1.msra.mxu0 0.0
  %359 = vmatprep.subr.mxu0 0.0
  %360 = vmatpush1.msra.mxu0 0.0
  %361 = vmatprep.subr.mxu0 0.0
  %362 = vmatpush1.msra.mxu0 0.0
  %363 = vmatprep.subr.mxu0 0.0
  %364 = vmatpush1.msra.mxu0 0.0
  %365 = vmatprep.subr.mxu0 0.0
  %366 = vmatpush1.msra.mxu0 0.0
  %367 = vmatprep.subr.mxu0 0.0
  %368 = vmatpush1.msra.mxu0 0.0
  %369 = vmatprep.subr.mxu0 0.0
  %370 = vmatpush1.msra.mxu0 0.0
  %371 = vmatprep.subr.mxu0 0.0
  %372 = vmatpush1.msra.mxu0 0.0
  %373 = vmatprep.subr.mxu0 0.0
  %374 = vmatpush1.msra.mxu0 0.0
  %375 = vmatprep.subr.mxu0 0.0
  %376 = vmatpush1.msra.mxu0 0.0
  %377 = vmatprep.subr.mxu0 0.0
  %378 = vmatpush1.msra.mxu0 0.0
  %379 = vmatprep.subr.mxu0 0.0
  %380 = vmatpush1.msra.mxu0 0.0
  %381 = vmatprep.subr.mxu0 0.0
  %382 = vmatpush1.msra.mxu0 %v66
  %383 = vmatprep.subr.mxu0 0.0
  %384 = vmatpush1.msra.mxu0 %v22
  %385 = vmatprep.subr.mxu0 0.0
  %386 = vmatpush2.msra.mxu0 0.0
  %387 = vmatprep.subr.mxu0 0.0
  %388 = vmatpush2.msra.mxu0 0.0
  %389 = vmatprep.subr.mxu0 0.0
  %390 = vmatpush2.msra.mxu0 0.0
  %391 = vmatprep.subr.mxu0 0.0
  %392 = vmatpush2.msra.mxu0 0.0
  %393 = vmatprep.subr.mxu0 0.0
  %394 = vmatpush2.msra.mxu0 0.0
  %395 = vmatprep.subr.mxu0 0.0
  %396 = vmatpush2.msra.mxu0 0.0
  %397 = vmatprep.subr.mxu0 0.0
  %398 = vmatpush2.msra.mxu0 0.0
  %399 = vmatprep.subr.mxu0 0.0
  %400 = vmatpush2.msra.mxu0 0.0
  %401 = vmatprep.subr.mxu0 0.0
  %402 = vmatpush2.msra.mxu0 0.0
  %403 = vmatprep.subr.mxu0 0.0
  %404 = vmatpush2.msra.mxu0 0.0
  %405 = vmatprep.subr.mxu0 0.0
  %406 = vmatpush2.msra.mxu0 0.0
  %407 = vmatprep.subr.mxu0 0.0
  %408 = vmatpush2.msra.mxu0 0.0
  %409 = vmatprep.subr.mxu0 0.0
  %410 = vmatpush2.msra.mxu0 0.0
  %411 = vmatprep.subr.mxu0 0.0
  %412 = vmatpush2.msra.mxu0 0.0
  %413 = vmatprep.subr.mxu0 0.0
  %414 = vmatpush2.msra.mxu0 0.0
  %415 = vmatprep.subr.mxu0 0.0
  %416 = vmatpush2.msra.mxu0 0.0
  %417 = vmatprep.mubr.f32.mxu0 0.0
  %418 = vmatmul.mubr.f32.gmra.mxu0 %v32
  %v419 = vpop.f32.mrf.mxu0
  %v420 = vadd.f32 0.0, %v419
  %v421 = vpop.f32.mrf.mxu0
  %422 = vmatprep.mubr.f32.mxu0 0.0
  %423 = vmatmul.mubr.f32.gmra.mxu0 %v35
  %v424 = vpop.f32.mrf.mxu0
  %v425 = vadd.f32 0.0, %v424
  %v426 = vpop.f32.mrf.mxu0
  %427 = vmatprep.mubr.f32.mxu0 0.0
  %428 = vmatmul.mubr.f32.gmra.mxu0 %v38
  %v429 = vpop.f32.mrf.mxu0
  %v430 = vadd.f32 0.0, %v429
  %v431 = vpop.f32.mrf.mxu0
  %432 = vmatprep.mubr.f32.mxu0 0.0
  %433 = vmatmul.mubr.f32.gmra.mxu0 %v41
  %v434 = vpop.f32.mrf.mxu0
  %v435 = vadd.f32 0.0, %v434
  %v436 = vpop.f32.mrf.mxu0
  %437 = vmatprep.mubr.f32.mxu0 0.0
  %438 = vmatmul.mubr.f32.gmra.mxu0 %v44
  %v439 = vpop.f32.mrf.mxu0
  %v440 = vadd.f32 0.0, %v439
  %v441 = vpop.f32.mrf.mxu0
  %442 = vdwg.mxu0
  %443 = vst [vmem:[%s2] sm:$0xff] %v135
  %444 = vst [vmem:[%s2 + $0x8] sm:$0xff] %v137
  %445 = vst [vmem:[%s2 + $0x10] sm:$0xff] %v230
  %446 = vst [vmem:[%s2 + $0x18] sm:$0xff] %v232
  %447 = vst [vmem:[%s2 + $0x20] sm:$0xff] %v325
  %448 = vst [vmem:[%s2 + $0x28] sm:$0xff] %v327
  %449 = vst [vmem:[%s2 + $0x30] sm:$0xff] %v420
  %450 = vst [vmem:[%s2 + $0x38] sm:$0xff] %v141
  %451 = vst [vmem:[%s2 + $0x40] sm:$0xff] %v143
  %452 = vst [vmem:[%s2 + $0x48] sm:$0xff] %v236
  %453 = vst [vmem:[%s2 + $0x50] sm:$0xff] %v238
  %454 = vst [vmem:[%s2 + $0x58] sm:$0xff] %v331
  %455 = vst [vmem:[%s2 + $0x60] sm:$0xff] %v333
  %456 = vst [vmem:[%s2 + $0x68] sm:$0xff] %v425
  %457 = vst [vmem:[%s2 + $0x70] sm:$0xff] %v147
  %458 = vst [vmem:[%s2 + $0x78] sm:$0xff] %v149
  %459 = vst [vmem:[%s2 + $0x80] sm:$0xff] %v242
  %460 = vst [vmem:[%s2 + $0x88] sm:$0xff] %v244
  %461 = vst [vmem:[%s2 + $0x90] sm:$0xff] %v337
  %462 = vst [vmem:[%s2 + $0x98] sm:$0xff] %v339
  %463 = vst [vmem:[%s2 + $0xa0] sm:$0xff] %v430
  %464 = vst [vmem:[%s2 + $0xa8] sm:$0xff] %v153
  %465 = vst [vmem:[%s2 + $0xb0] sm:$0xff] %v155
  %466 = vst [vmem:[%s2 + $0xb8] sm:$0xff] %v248
  %467 = vst [vmem:[%s2 + $0xc0] sm:$0xff] %v250
  %468 = vst [vmem:[%s2 + $0xc8] sm:$0xff] %v343
  %469 = vst [vmem:[%s2 + $0xd0] sm:$0xff] %v345
  %470 = vst [vmem:[%s2 + $0xd8] sm:$0xff] %v435
  %471 = vst [vmem:[%s2 + $0xe0] sm:$0x7] %v159
  %472 = vst [vmem:[%s2 + $0xe8] sm:$0x7] %v161
  %473 = vst [vmem:[%s2 + $0xf0] sm:$0x7] %v254
  %474 = vst [vmem:[%s2 + $0xf8] sm:$0x7] %v256
  %475 = vst [vmem:[%s2 + $0x100] sm:$0x7] %v349
  %476 = vst [vmem:[%s2 + $0x108] sm:$0x7] %v351
  %477 = vst [vmem:[%s2 + $0x110] sm:$0x7] %v440
  // Predicated region
  $region10: #{conv_transpose_model.1} parent=0 // pred_check
    _
  $region11: #{conv_transpose_model.1} parent=0 // pred_check_branch
    %479 = sbr.rel (0) target = $region13
  $region12: #{conv_transpose_model.1} parent=0 // pred_region
    _
  $region13: #{conv_transpose_model.1} parent=0 // pred_fallthru
    _
  // Predicated region
  $region14: #{conv_transpose_model.1} parent=0 // pred_check
    _
  $region15: #{conv_transpose_model.1} parent=0 // pred_check_branch
    %481 = sbr.rel (0) target = $region17
  $region16: #{conv_transpose_model.1} parent=0 // pred_region
    _
  $region17: #{conv_transpose_model.1} parent=0 // pred_fallthru
    _

</llo_original>
